<compile_context>
chip_gen: v7x
topology: tpu7x:2x2x1
jax: 0.10.0
libtpu: 0.0.40
codegen_flags: <defaults>
</compile_context>

<pallas_src>
import functools

import jax
import jax.numpy as jnp
from jax.experimental import pallas as pl
from jax.experimental.pallas import tpu as pltpu

BN_EPS = 1e-5
LEAKY_SLOPE = 0.01
LANE = 128
SUBLANE = 8


def _round_up(v: int, m: int) -> int:
    return (v + m - 1) // m * m


def _make_kernel(nlayers: int):
    """Fused [Linear(+folded BN) -> LeakyReLU]*nlayers -> Linear over one batch tile."""

    def kernel(*refs):
        if nlayers > 1:
            (x_ref, w0_ref, b0_ref, wh_ref, bh_ref, wo_ref, bo_ref, o_ref) = refs
        else:
            (x_ref, w0_ref, b0_ref, wo_ref, bo_ref, o_ref) = refs
            wh_ref = bh_ref = None

        # Layer 0: Linear (BN already folded into w0/b0) + LeakyReLU.
        h = jnp.dot(x_ref[...], w0_ref[...],
                    preferred_element_type=jnp.float32) + b0_ref[...]
        h = jnp.maximum(h, LEAKY_SLOPE * h)

        # Hidden layers 1..nlayers-1 (statically unrolled).
        for l in range(nlayers - 1):
            h = jnp.dot(h, wh_ref[l],
                        preferred_element_type=jnp.float32) + bh_ref[l]
            h = jnp.maximum(h, LEAKY_SLOPE * h)

        # Final Linear (no BN / activation).
        o_ref[...] = (jnp.dot(h, wo_ref[...],
                              preferred_element_type=jnp.float32)
                      + bo_ref[...]).astype(o_ref.dtype)

    return kernel


def _fold_and_pad_params(params, nlayers, h_pad):
    """Fold eval-mode BN into each Linear; zero-pad only the hidden dim to 128-mult."""
    (w0, b0, wh, bh, gamma, beta, rmean, rvar, wo, bo) = params
    F, H = w0.shape
    T = wo.shape[1]

    inv_std = jax.lax.rsqrt(rvar + BN_EPS)        # (nlayers, H)
    scale = gamma * inv_std                       # (nlayers, H)
    shift = beta - rmean * scale                  # (nlayers, H)

    w0f = w0 * scale[0][None, :]
    b0f = b0 * scale[0][None, :] + shift[0][None, :]

    w0p = jnp.zeros((F, h_pad), jnp.float32).at[:, :H].set(w0f)
    b0p = jnp.zeros((1, h_pad), jnp.float32).at[:, :H].set(b0f)
    wop = jnp.zeros((h_pad, T), jnp.float32).at[:H, :].set(wo)
    bop = bo.astype(jnp.float32)                  # (1, T), unpadded (masked store ok)

    if nlayers > 1:
        whf = wh * scale[1:][:, None, :]          # (nlayers-1, H, H)
        bhf = bh * scale[1:] + shift[1:]          # (nlayers-1, H)
        whp = jnp.zeros((nlayers - 1, h_pad, h_pad), jnp.float32).at[:, :H, :H].set(whf)
        bhp = jnp.zeros((nlayers - 1, h_pad), jnp.float32).at[:, :H].set(bhf)
        return (w0p, b0p, whp, bhp, wop, bop)

    return (w0p, b0p, wop, bop)


def _vmem_capacity_bytes() -> int:
    """Per-core VMEM capacity (64 MiB on v7x, 128 MiB on v5e/v6e); safe fallback."""
    try:
        return int(pltpu.get_tpu_info().vmem_capacity_bytes)
    except Exception:
        return 128 * 1024 * 1024


def _weight_specs(nlayers, F, T, h_pad, single_buffer):
    """Constant-index (grid-invariant) BlockSpecs for the resident weights/biases."""

    def spec(shape):
        nd = len(shape)
        index_map = lambda i: (0,) * nd
        if single_buffer:
            # Constant index_map => never re-DMA'd; a 2nd buffer only wastes VMEM.
            return pl.BlockSpec(shape, index_map,
                                pipeline_mode=pl.Buffered(buffer_count=1))
        return pl.BlockSpec(shape, index_map)

    if nlayers > 1:
        return [
            spec((F, h_pad)),                       # w0
            spec((1, h_pad)),                       # b0
            spec((nlayers - 1, h_pad, h_pad)),      # wh
            spec((nlayers - 1, h_pad)),             # bh
            spec((h_pad, T)),                       # wo
            spec((1, T)),                           # bo
        ]
    return [spec((F, h_pad)), spec((1, h_pad)), spec((h_pad, T)), spec((1, T))]


def _pick_batch_tile(B, F, T, h_pad, weight_bytes, vmem_capacity, weight_bufs):
    """Largest batch tile that fits VMEM; per-generation caps; >=2 grid steps if possible."""
    tb_full = _round_up(B, SUBLANE)
    # 64 MiB VMEM (v7x): cap at 512.  128 MiB (v5e/v6e): up to 1024, 256-multiples.
    cap = 512 if vmem_capacity <= (64 << 20) else 1024

    # Per-batch-row bytes: double-buffered x and out tiles + two live h temporaries.
    per_row_bytes = (2 * F + 2 * T + 2 * h_pad) * 4
    avail = max(per_row_bytes * SUBLANE,
                int(vmem_capacity * 0.5) - weight_bufs * weight_bytes)
    fit = max(SUBLANE, avail // per_row_bytes)

    tb = int(min(cap, tb_full, fit))
    if tb >= 256:
        tb -= tb % 256      # keep the 256-wide v6e MXU fed on the M dimension
    elif tb >= 128:
        tb -= tb % 128      # 128 is native for v5e's 4x128x128 MXU
    else:
        tb -= tb % SUBLANE
    tb = max(SUBLANE, tb)

    # Megacore (v7x has 2 TensorCores): prefer >= 2 grid steps when the batch allows.
    if pl.cdiv(B, tb) == 1 and B > SUBLANE:
        tb = max(SUBLANE, _round_up(pl.cdiv(B, 2), SUBLANE))
    return tb


def regularized_regression_forward(x, params, nlayers, single_buffer_weights=True):
    """Batch-tiled, pipelined fused forward pass (no wrapper-side pad/slice passes)."""
    B, F = x.shape
    H = params[0].shape[1]
    T = params[-2].shape[1]
    h_pad = _round_up(H, LANE)

    x = x.astype(jnp.float32)
    packed = _fold_and_pad_params(params, nlayers, h_pad)
    weight_bytes = sum(int(a.size) * 4 for a in packed)
    weight_bufs = 1 if single_buffer_weights else 2

    vmem_capacity = _vmem_capacity_bytes()
    TB = _pick_batch_tile(B, F, T, h_pad, weight_bytes, vmem_capacity, weight_bufs)

    # Unpadded x / out: last block dim equals the full array dim (legal), partial
    # final batch tile handled by Pallas masking.
    x_spec = pl.BlockSpec((TB, F), lambda i: (i, 0))
    o_spec = pl.BlockSpec((TB, T), lambda i: (i, 0))
    w_specs = _weight_specs(nlayers, F, T, h_pad, single_buffer_weights)

    # VMEM budget: resident weights (x buffer count) + double-buffered x/out tiles
    # + live intermediate h temporaries + headroom; clamp to the chip's capacity.
    act_bytes = (2 * TB * F + 2 * TB * T + 2 * TB * h_pad) * 4
    vmem_limit = max(32 << 20, weight_bufs * weight_bytes + act_bytes + (4 << 20))
    vmem_limit = min(vmem_limit, vmem_capacity - (4 << 20))

    flops = 2 * B * (F * H + (nlayers - 1) * H * H + H * T)
    bytes_accessed = (B * (F + T)) * 4 + weight_bytes
    cost = pl.CostEstimate(flops=flops, transcendentals=0,
                           bytes_accessed=bytes_accessed)

    return pl.pallas_call(
        _make_kernel(nlayers),
        out_shape=jax.ShapeDtypeStruct((B, T), jnp.float32),
        grid=(pl.cdiv(B, TB),),
        in_specs=[x_spec] + w_specs,
        out_specs=o_spec,
        compiler_params=pltpu.CompilerParams(
            dimension_semantics=("parallel",),
            vmem_limit_bytes=int(vmem_limit)),
        cost_estimate=cost,
    )(x, *packed)


def init_params(key, nfeatures, ntargets, nlayers, hidden_size):
    """Deterministic synthetic PyTorch-style parameters (not a checkpoint load)."""
    ks = jax.random.split(key, 8)
    n_hidden = nlayers - 1   # zero-size arrays when nlayers == 1 (never passed to kernel)

    w0 = jax.random.normal(ks[0], (nfeatures, hidden_size), jnp.float32) * 0.1
    b0 = jax.random.normal(ks[1], (1, hidden_size), jnp.float32) * 0.1
    wh = jax.random.normal(ks[2], (n_hidden, hidden_size, hidden_size), jnp.float32) * 0.1
    bh = jax.random.normal(ks[3], (n_hidden, hidden_size), jnp.float32) * 0.1
    gamma = 1.0 + 0.1 * jax.random.normal(ks[4], (nlayers, hidden_size), jnp.float32)
    beta = 0.1 * jax.random.normal(ks[5], (nlayers, hidden_size), jnp.float32)
    rmean = 0.1 * jax.random.normal(ks[6], (nlayers, hidden_size), jnp.float32)
    rvar = jnp.abs(1.0 + 0.1 * jax.random.normal(ks[7], (nlayers, hidden_size),
                                                 jnp.float32))  # keep > 0
    wo = jax.random.normal(jax.random.fold_in(key, 100),
                           (hidden_size, ntargets), jnp.float32) * 0.1
    bo = jax.random.normal(jax.random.fold_in(key, 101),
                           (1, ntargets), jnp.float32) * 0.1
    return (w0, b0, wh, bh, gamma, beta, rmean, rvar, wo, bo)


def reference_forward(x, params, nlayers):
    """Pure-JAX reference of the same (eval-mode) forward pass (unfolded BN)."""
    (w0, b0, wh, bh, gamma, beta, rmean, rvar, wo, bo) = params
    h = x @ w0 + b0
    for l in range(nlayers):
        if l > 0:
            h = h @ wh[l - 1] + bh[l - 1]
        h = (h - rmean[l]) / jnp.sqrt(rvar[l] + BN_EPS) * gamma[l] + beta[l]
        h = jnp.where(h >= 0.0, h, LEAKY_SLOPE * h)
    return h @ wo + bo


def _build_forward(nlayers, single_buffer_weights):
    return jax.jit(functools.partial(regularized_regression_forward,
                                     nlayers=nlayers,
                                     single_buffer_weights=single_buffer_weights))


if __name__ == "__main__":
    # Small shapes consistent with the module: x is (batch, nfeatures).
    batch, nfeatures, ntargets, nlayers, hidden_size = 8, 16, 4, 3, 32

    key = jax.random.PRNGKey(0)
    kx, kp = jax.random.split(key)
    x = jax.random.normal(kx, (batch, nfeatures), jnp.float32)
    params = init_params(kp, nfeatures, ntargets, nlayers, hidden_size)

    try:
        fwd = _build_forward(nlayers, single_buffer_weights=True)
        out = jax.block_until_ready(fwd(x, params))
    except Exception:
        # Fallback if this jax build rejects pl.Buffered(1) on constant-index specs.
        fwd = _build_forward(nlayers, single_buffer_weights=False)
        out = jax.block_until_ready(fwd(x, params))

    ref = reference_forward(x, params, nlayers)
    assert out.shape == (batch, ntargets)
    assert jnp.allclose(out, ref, atol=1e-4, rtol=1e-4), "mismatch vs reference"

    print("KERNEL_OK")
</pallas_src>

<mosaic_0001>
module attributes {stable_mosaic.version = 11 : i64} {
  func.func @kernel(%arg0: i32, %arg1: memref<8x16xf32, #tpu.memory_space<vmem>>, %arg2: memref<16x128xf32, #tpu.memory_space<vmem>>, %arg3: memref<1x128xf32, #tpu.memory_space<vmem>>, %arg4: memref<2x128x128xf32, #tpu.memory_space<vmem>>, %arg5: memref<2x128xf32, #tpu.memory_space<vmem>>, %arg6: memref<128x4xf32, #tpu.memory_space<vmem>>, %arg7: memref<1x4xf32, #tpu.memory_space<vmem>>, %arg8: memref<8x4xf32, #tpu.memory_space<vmem>>) attributes {dimension_semantics = [#tpu.dimension_semantics<parallel>], iteration_bounds = array<i64: 1>, scalar_prefetch = 0 : i64, scratch_operands = 0 : i64, tpu.core_type = #tpu.core_type<tc>, window_params = [{transform_indices = @transform_0, window_bounds = array<i64: 8, 16>}, {pipeline_mode = #tpu.pipeline_mode<synchronous>, transform_indices = @transform_1, window_bounds = array<i64: 16, 128>}, {pipeline_mode = #tpu.pipeline_mode<synchronous>, transform_indices = @transform_2, window_bounds = array<i64: 1, 128>}, {pipeline_mode = #tpu.pipeline_mode<synchronous>, transform_indices = @transform_3, window_bounds = array<i64: 2, 128, 128>}, {pipeline_mode = #tpu.pipeline_mode<synchronous>, transform_indices = @transform_4, window_bounds = array<i64: 2, 128>}, {pipeline_mode = #tpu.pipeline_mode<synchronous>, transform_indices = @transform_5, window_bounds = array<i64: 128, 4>}, {pipeline_mode = #tpu.pipeline_mode<synchronous>, transform_indices = @transform_6, window_bounds = array<i64: 1, 4>}, {transform_indices = @transform_7, window_bounds = array<i64: 8, 4>}]} {
    %c0 = arith.constant 0 : index
    %c0_0 = arith.constant 0 : index
    %0 = vector.load %arg1[%c0, %c0_0] : memref<8x16xf32, #tpu.memory_space<vmem>>, vector<8x16xf32>
    %c0_1 = arith.constant 0 : index
    %c0_2 = arith.constant 0 : index
    %1 = vector.load %arg2[%c0_1, %c0_2] : memref<16x128xf32, #tpu.memory_space<vmem>>, vector<16x128xf32>
    %cst = arith.constant dense<0.000000e+00> : vector<8x128xf32>
    %2 = tpu.matmul %0, %1, %cst {dimension_numbers = #tpu.dot_dimension_numbers<[1], [0], [0], [1], [0, 0, 1, 1], [], []>} : vector<8x16xf32>, vector<16x128xf32>, vector<8x128xf32> -> vector<8x128xf32>
    %c0_3 = arith.constant 0 : index
    %c0_4 = arith.constant 0 : index
    %3 = vector.load %arg3[%c0_3, %c0_4] : memref<1x128xf32, #tpu.memory_space<vmem>>, vector<1x128xf32>
    %4 = vector.broadcast %3 : vector<1x128xf32> to vector<8x128xf32>
    %5 = arith.addf %2, %4 : vector<8x128xf32>
    %cst_5 = arith.constant 0.00999999977 : f32
    %6 = vector.broadcast %cst_5 : f32 to vector<8x128xf32>
    %7 = arith.mulf %6, %5 : vector<8x128xf32>
    %8 = arith.maximumf %5, %7 : vector<8x128xf32>
    %c0_6 = arith.constant 0 : index
    %c0_7 = arith.constant 0 : index
    %c0_8 = arith.constant 0 : index
    %9 = vector.load %arg4[%c0_6, %c0_7, %c0_8] : memref<2x128x128xf32, #tpu.memory_space<vmem>>, vector<1x128x128xf32>
    %10 = vector.shape_cast %9 : vector<1x128x128xf32> to vector<128x128xf32>
    %cst_9 = arith.constant dense<0.000000e+00> : vector<8x128xf32>
    %11 = tpu.matmul %8, %10, %cst_9 {dimension_numbers = #tpu.dot_dimension_numbers<[1], [0], [0], [1], [0, 0, 1, 1], [], []>} : vector<8x128xf32>, vector<128x128xf32>, vector<8x128xf32> -> vector<8x128xf32>
    %c0_10 = arith.constant 0 : index
    %c0_11 = arith.constant 0 : index
    %12 = vector.load %arg5[%c0_10, %c0_11] : memref<2x128xf32, #tpu.memory_space<vmem>>, vector<1x128xf32>
    %13 = vector.shape_cast %12 : vector<1x128xf32> to vector<128xf32>
    %14 = vector.shape_cast %13 : vector<128xf32> to vector<1x128xf32>
    %15 = vector.broadcast %14 : vector<1x128xf32> to vector<8x128xf32>
    %16 = arith.addf %11, %15 : vector<8x128xf32>
    %cst_12 = arith.constant 0.00999999977 : f32
    %17 = vector.broadcast %cst_12 : f32 to vector<8x128xf32>
    %18 = arith.mulf %17, %16 : vector<8x128xf32>
    %19 = arith.maximumf %16, %18 : vector<8x128xf32>
    %c1 = arith.constant 1 : index
    %c0_13 = arith.constant 0 : index
    %c0_14 = arith.constant 0 : index
    %20 = vector.load %arg4[%c1, %c0_13, %c0_14] : memref<2x128x128xf32, #tpu.memory_space<vmem>>, vector<1x128x128xf32>
    %21 = vector.shape_cast %20 : vector<1x128x128xf32> to vector<128x128xf32>
    %cst_15 = arith.constant dense<0.000000e+00> : vector<8x128xf32>
    %22 = tpu.matmul %19, %21, %cst_15 {dimension_numbers = #tpu.dot_dimension_numbers<[1], [0], [0], [1], [0, 0, 1, 1], [], []>} : vector<8x128xf32>, vector<128x128xf32>, vector<8x128xf32> -> vector<8x128xf32>
    %c1_16 = arith.constant 1 : index
    %c0_17 = arith.constant 0 : index
    %23 = vector.load %arg5[%c1_16, %c0_17] : memref<2x128xf32, #tpu.memory_space<vmem>>, vector<1x128xf32>
    %24 = vector.shape_cast %23 : vector<1x128xf32> to vector<128xf32>
    %25 = vector.shape_cast %24 : vector<128xf32> to vector<1x128xf32>
    %26 = vector.broadcast %25 : vector<1x128xf32> to vector<8x128xf32>
    %27 = arith.addf %22, %26 : vector<8x128xf32>
    %cst_18 = arith.constant 0.00999999977 : f32
    %28 = vector.broadcast %cst_18 : f32 to vector<8x128xf32>
    %29 = arith.mulf %28, %27 : vector<8x128xf32>
    %30 = arith.maximumf %27, %29 : vector<8x128xf32>
    %c0_19 = arith.constant 0 : index
    %c0_20 = arith.constant 0 : index
    %31 = vector.load %arg6[%c0_19, %c0_20] : memref<128x4xf32, #tpu.memory_space<vmem>>, vector<128x4xf32>
    %cst_21 = arith.constant dense<0.000000e+00> : vector<8x4xf32>
    %32 = tpu.matmul %30, %31, %cst_21 {dimension_numbers = #tpu.dot_dimension_numbers<[1], [0], [0], [1], [0, 0, 1, 1], [], []>} : vector<8x128xf32>, vector<128x4xf32>, vector<8x4xf32> -> vector<8x4xf32>
    %c0_22 = arith.constant 0 : index
    %c0_23 = arith.constant 0 : index
    %33 = vector.load %arg7[%c0_22, %c0_23] : memref<1x4xf32, #tpu.memory_space<vmem>>, vector<1x4xf32>
    %34 = vector.broadcast %33 : vector<1x4xf32> to vector<8x4xf32>
    %35 = arith.addf %32, %34 : vector<8x4xf32>
    %c0_24 = arith.constant 0 : index
    %c0_25 = arith.constant 0 : index
    %36 = vector.load %arg8[%c0_24, %c0_25] : memref<8x4xf32, #tpu.memory_space<vmem>>, vector<8x4xf32>
    tpu.vector_store %arg8[%c0_24, %c0_25], %35 {strides = array<i32>} : memref<8x4xf32, #tpu.memory_space<vmem>>, vector<8x4xf32>,
    return
  }
  func.func @transform_0(%arg0: i32) -> (i32, i32) {
    %c0_i32 = arith.constant 0 : i32
    %c0_i32_0 = arith.constant 0 : i32
    return %arg0, %c0_i32 : i32, i32
  }
  func.func @transform_1(%arg0: i32) -> (i32, i32) {
    %c0_i32 = arith.constant 0 : i32
    %c0_i32_0 = arith.constant 0 : i32
    %c0_i32_1 = arith.constant 0 : i32
    return %c0_i32, %c0_i32_0 : i32, i32
  }
  func.func @transform_2(%arg0: i32) -> (i32, i32) {
    %c0_i32 = arith.constant 0 : i32
    %c0_i32_0 = arith.constant 0 : i32
    %c0_i32_1 = arith.constant 0 : i32
    return %c0_i32, %c0_i32_0 : i32, i32
  }
  func.func @transform_3(%arg0: i32) -> (i32, i32, i32) {
    %c0_i32 = arith.constant 0 : i32
    %c0_i32_0 = arith.constant 0 : i32
    %c0_i32_1 = arith.constant 0 : i32
    %c0_i32_2 = arith.constant 0 : i32
    return %c0_i32, %c0_i32_0, %c0_i32_1 : i32, i32, i32
  }
  func.func @transform_4(%arg0: i32) -> (i32, i32) {
    %c0_i32 = arith.constant 0 : i32
    %c0_i32_0 = arith.constant 0 : i32
    %c0_i32_1 = arith.constant 0 : i32
    return %c0_i32, %c0_i32_0 : i32, i32
  }
  func.func @transform_5(%arg0: i32) -> (i32, i32) {
    %c0_i32 = arith.constant 0 : i32
    %c0_i32_0 = arith.constant 0 : i32
    %c0_i32_1 = arith.constant 0 : i32
    return %c0_i32, %c0_i32_0 : i32, i32
  }
  func.func @transform_6(%arg0: i32) -> (i32, i32) {
    %c0_i32 = arith.constant 0 : i32
    %c0_i32_0 = arith.constant 0 : i32
    %c0_i32_1 = arith.constant 0 : i32
    return %c0_i32, %c0_i32_0 : i32, i32
  }
  func.func @transform_7(%arg0: i32) -> (i32, i32) {
    %c0_i32 = arith.constant 0 : i32
    %c0_i32_0 = arith.constant 0 : i32
    return %arg0, %c0_i32 : i32, i32
  }
}

module attributes {stable_mosaic.version = 11 : i64} {
  func.func @kernel(%arg0: i32, %arg1: memref<8x16xf32, #tpu.memory_space<vmem>>, %arg2: memref<16x128xf32, #tpu.memory_space<vmem>>, %arg3: memref<1x128xf32, #tpu.memory_space<vmem>>, %arg4: memref<2x128x128xf32, #tpu.memory_space<vmem>>, %arg5: memref<2x128xf32, #tpu.memory_space<vmem>>, %arg6: memref<128x4xf32, #tpu.memory_space<vmem>>, %arg7: memref<1x4xf32, #tpu.memory_space<vmem>>, %arg8: memref<8x4xf32, #tpu.memory_space<vmem>>) attributes {dimension_semantics = [#tpu.dimension_semantics<parallel>], iteration_bounds = array<i64: 1>, scalar_prefetch = 0 : i64, scratch_operands = 0 : i64, tpu.core_type = #tpu.core_type<tc>, window_params = [{transform_indices = @transform_0, window_bounds = array<i64: 8, 16>}, {pipeline_mode = #tpu.pipeline_mode<synchronous>, transform_indices = @transform_1, window_bounds = array<i64: 16, 128>}, {pipeline_mode = #tpu.pipeline_mode<synchronous>, transform_indices = @transform_2, window_bounds = array<i64: 1, 128>}, {pipeline_mode = #tpu.pipeline_mode<synchronous>, transform_indices = @transform_3, window_bounds = array<i64: 2, 128, 128>}, {pipeline_mode = #tpu.pipeline_mode<synchronous>, transform_indices = @transform_4, window_bounds = array<i64: 2, 128>}, {pipeline_mode = #tpu.pipeline_mode<synchronous>, transform_indices = @transform_5, window_bounds = array<i64: 128, 4>}, {pipeline_mode = #tpu.pipeline_mode<synchronous>, transform_indices = @transform_6, window_bounds = array<i64: 1, 4>}, {transform_indices = @transform_7, window_bounds = array<i64: 8, 4>}]} {
    %c0 = arith.constant 0 : index
    %c0_0 = arith.constant 0 : index
    %0 = vector.load %arg1[%c0, %c0_0] : memref<8x16xf32, #tpu.memory_space<vmem>>, vector<8x16xf32>
    %c0_1 = arith.constant 0 : index
    %c0_2 = arith.constant 0 : index
    %1 = vector.load %arg2[%c0_1, %c0_2] : memref<16x128xf32, #tpu.memory_space<vmem>>, vector<16x128xf32>
    %cst = arith.constant dense<0.000000e+00> : vector<8x128xf32>
    %2 = tpu.matmul %0, %1, %cst {dimension_numbers = #tpu.dot_dimension_numbers<[1], [0], [0], [1], [0, 0, 1, 1], [], []>} : vector<8x16xf32>, vector<16x128xf32>, vector<8x128xf32> -> vector<8x128xf32>
    %c0_3 = arith.constant 0 : index
    %c0_4 = arith.constant 0 : index
    %3 = vector.load %arg3[%c0_3, %c0_4] : memref<1x128xf32, #tpu.memory_space<vmem>>, vector<1x128xf32>
    %4 = vector.broadcast %3 : vector<1x128xf32> to vector<8x128xf32>
    %5 = arith.addf %2, %4 : vector<8x128xf32>
    %cst_5 = arith.constant 0.00999999977 : f32
    %6 = vector.broadcast %cst_5 : f32 to vector<8x128xf32>
    %7 = arith.mulf %6, %5 : vector<8x128xf32>
    %8 = arith.maximumf %5, %7 : vector<8x128xf32>
    %c0_6 = arith.constant 0 : index
    %c0_7 = arith.constant 0 : index
    %c0_8 = arith.constant 0 : index
    %9 = vector.load %arg4[%c0_6, %c0_7, %c0_8] : memref<2x128x128xf32, #tpu.memory_space<vmem>>, vector<1x128x128xf32>
    %10 = vector.shape_cast %9 : vector<1x128x128xf32> to vector<128x128xf32>
    %cst_9 = arith.constant dense<0.000000e+00> : vector<8x128xf32>
    %11 = tpu.matmul %8, %10, %cst_9 {dimension_numbers = #tpu.dot_dimension_numbers<[1], [0], [0], [1], [0, 0, 1, 1], [], []>} : vector<8x128xf32>, vector<128x128xf32>, vector<8x128xf32> -> vector<8x128xf32>
    %c0_10 = arith.constant 0 : index
    %c0_11 = arith.constant 0 : index
    %12 = vector.load %arg5[%c0_10, %c0_11] : memref<2x128xf32, #tpu.memory_space<vmem>>, vector<1x128xf32>
    %13 = vector.shape_cast %12 : vector<1x128xf32> to vector<128xf32>
    %14 = vector.shape_cast %13 : vector<128xf32> to vector<1x128xf32>
    %15 = vector.broadcast %14 : vector<1x128xf32> to vector<8x128xf32>
    %16 = arith.addf %11, %15 : vector<8x128xf32>
    %cst_12 = arith.constant 0.00999999977 : f32
    %17 = vector.broadcast %cst_12 : f32 to vector<8x128xf32>
    %18 = arith.mulf %17, %16 : vector<8x128xf32>
    %19 = arith.maximumf %16, %18 : vector<8x128xf32>
    %c1 = arith.constant 1 : index
    %c0_13 = arith.constant 0 : index
    %c0_14 = arith.constant 0 : index
    %20 = vector.load %arg4[%c1, %c0_13, %c0_14] : memref<2x128x128xf32, #tpu.memory_space<vmem>>, vector<1x128x128xf32>
    %21 = vector.shape_cast %20 : vector<1x128x128xf32> to vector<128x128xf32>
    %cst_15 = arith.constant dense<0.000000e+00> : vector<8x128xf32>
    %22 = tpu.matmul %19, %21, %cst_15 {dimension_numbers = #tpu.dot_dimension_numbers<[1], [0], [0], [1], [0, 0, 1, 1], [], []>} : vector<8x128xf32>, vector<128x128xf32>, vector<8x128xf32> -> vector<8x128xf32>
    %c1_16 = arith.constant 1 : index
    %c0_17 = arith.constant 0 : index
    %23 = vector.load %arg5[%c1_16, %c0_17] : memref<2x128xf32, #tpu.memory_space<vmem>>, vector<1x128xf32>
    %24 = vector.shape_cast %23 : vector<1x128xf32> to vector<128xf32>
    %25 = vector.shape_cast %24 : vector<128xf32> to vector<1x128xf32>
    %26 = vector.broadcast %25 : vector<1x128xf32> to vector<8x128xf32>
    %27 = arith.addf %22, %26 : vector<8x128xf32>
    %cst_18 = arith.constant 0.00999999977 : f32
    %28 = vector.broadcast %cst_18 : f32 to vector<8x128xf32>
    %29 = arith.mulf %28, %27 : vector<8x128xf32>
    %30 = arith.maximumf %27, %29 : vector<8x128xf32>
    %c0_19 = arith.constant 0 : index
    %c0_20 = arith.constant 0 : index
    %31 = vector.load %arg6[%c0_19, %c0_20] : memref<128x4xf32, #tpu.memory_space<vmem>>, vector<128x4xf32>
    %cst_21 = arith.constant dense<0.000000e+00> : vector<8x4xf32>
    %32 = tpu.matmul %30, %31, %cst_21 {dimension_numbers = #tpu.dot_dimension_numbers<[1], [0], [0], [1], [0, 0, 1, 1], [], []>} : vector<8x128xf32>, vector<128x4xf32>, vector<8x4xf32> -> vector<8x4xf32>
    %c0_22 = arith.constant 0 : index
    %c0_23 = arith.constant 0 : index
    %33 = vector.load %arg7[%c0_22, %c0_23] : memref<1x4xf32, #tpu.memory_space<vmem>>, vector<1x4xf32>
    %34 = vector.broadcast %33 : vector<1x4xf32> to vector<8x4xf32>
    %35 = arith.addf %32, %34 : vector<8x4xf32>
    %c0_24 = arith.constant 0 : index
    %c0_25 = arith.constant 0 : index
    %36 = vector.load %arg8[%c0_24, %c0_25] : memref<8x4xf32, #tpu.memory_space<vmem>>, vector<8x4xf32>
    tpu.vector_store %arg8[%c0_24, %c0_25], %35 {strides = array<i32>} : memref<8x4xf32, #tpu.memory_space<vmem>>, vector<8x4xf32>,
    return
  }
  func.func @transform_0(%arg0: i32) -> (i32, i32) {
    %c0_i32 = arith.constant 0 : i32
    %c0_i32_0 = arith.constant 0 : i32
    return %arg0, %c0_i32 : i32, i32
  }
  func.func @transform_1(%arg0: i32) -> (i32, i32) {
    %c0_i32 = arith.constant 0 : i32
    %c0_i32_0 = arith.constant 0 : i32
    %c0_i32_1 = arith.constant 0 : i32
    return %c0_i32, %c0_i32_0 : i32, i32
  }
  func.func @transform_2(%arg0: i32) -> (i32, i32) {
    %c0_i32 = arith.constant 0 : i32
    %c0_i32_0 = arith.constant 0 : i32
    %c0_i32_1 = arith.constant 0 : i32
    return %c0_i32, %c0_i32_0 : i32, i32
  }
  func.func @transform_3(%arg0: i32) -> (i32, i32, i32) {
    %c0_i32 = arith.constant 0 : i32
    %c0_i32_0 = arith.constant 0 : i32
    %c0_i32_1 = arith.constant 0 : i32
    %c0_i32_2 = arith.constant 0 : i32
    return %c0_i32, %c0_i32_0, %c0_i32_1 : i32, i32, i32
  }
  func.func @transform_4(%arg0: i32) -> (i32, i32) {
    %c0_i32 = arith.constant 0 : i32
    %c0_i32_0 = arith.constant 0 : i32
    %c0_i32_1 = arith.constant 0 : i32
    return %c0_i32, %c0_i32_0 : i32, i32
  }
  func.func @transform_5(%arg0: i32) -> (i32, i32) {
    %c0_i32 = arith.constant 0 : i32
    %c0_i32_0 = arith.constant 0 : i32
    %c0_i32_1 = arith.constant 0 : i32
    return %c0_i32, %c0_i32_0 : i32, i32
  }
  func.func @transform_6(%arg0: i32) -> (i32, i32) {
    %c0_i32 = arith.constant 0 : i32
    %c0_i32_0 = arith.constant 0 : i32
    %c0_i32_1 = arith.constant 0 : i32
    return %c0_i32, %c0_i32_0 : i32, i32
  }
  func.func @transform_7(%arg0: i32) -> (i32, i32) {
    %c0_i32 = arith.constant 0 : i32
    %c0_i32_0 = arith.constant 0 : i32
    return %arg0, %c0_i32 : i32, i32
  }
}

</mosaic_0001>

<llo_original>
// kernel: regularized_regression_forward.1
$region0: #{regularized_regression_forward.1}
  #allocation0 [shape = 'u32[]', space=smem, size = 0x4, offset = 0x4, fixed_abs, tag = 'smem constant byte address 0x4 - core index']
  #allocation1 [shape = 'u32[144,128]{1,0:T(1,128)}', space=vmem, size = 0x12000, scoped, tag = 'internal scratch']
  %s0 = inlined_call_operand.vmem [shape: f32[8,16], index: 0, kind: input, shape index: {}]
  %s1 = inlined_call_operand.vmem [shape: f32[16,128], index: 1, kind: input, shape index: {}]
  %s2 = inlined_call_operand.vmem [shape: f32[1,128], index: 2, kind: input, shape index: {}]
  %s3 = inlined_call_operand.vmem [shape: f32[2,128,128], index: 3, kind: input, shape index: {}]
  %s4 = inlined_call_operand.vmem [shape: f32[2,128], index: 4, kind: input, shape index: {}]
  %s5 = inlined_call_operand.vmem [shape: f32[128,4], index: 5, kind: input, shape index: {}]
  %s6 = inlined_call_operand.vmem [shape: f32[1,4], index: 6, kind: input, shape index: {}]
  %s7 = inlined_call_operand.vmem [shape: f32[8,4], index: 7, kind: output, shape index: {}]
  %s8 = sld [smem:[#allocation0]]
  $region38: #{regularized_regression_forward.1} parent=0
    _
  %s10 = ssub.s32 1, %s8
  %s11 = scalar_select 0, %s10, %s8
  // Predicated region
  $region2: #{regularized_regression_forward.1} parent=0 // pred_check
    _
  $region3: #{regularized_regression_forward.1} parent=0 // pred_check_branch
    %13 = sbr.rel (0) target = $region5
  $region4: #{regularized_regression_forward.1} parent=0 // pred_region
    _
  $region5: #{regularized_regression_forward.1} parent=0 // pred_fallthru
    _
  // Predicated region
  $region6: #{regularized_regression_forward.1} parent=0 // pred_check
    _
  $region7: #{regularized_regression_forward.1} parent=0 // pred_check_branch
    %15 = sbr.rel (0) target = $region9
  $region8: #{regularized_regression_forward.1} parent=0 // pred_region
    _
  $region9: #{regularized_regression_forward.1} parent=0 // pred_fallthru
    _
  // Predicated region
  $region10: #{regularized_regression_forward.1} parent=0 // pred_check
    _
  $region11: #{regularized_regression_forward.1} parent=0 // pred_check_branch
    %17 = sbr.rel (0) target = $region13
  $region12: #{regularized_regression_forward.1} parent=0 // pred_region
    _
  $region13: #{regularized_regression_forward.1} parent=0 // pred_fallthru
    _
  // Predicated region
  $region14: #{regularized_regression_forward.1} parent=0 // pred_check
    _
  $region15: #{regularized_regression_forward.1} parent=0 // pred_check_branch
    %19 = sbr.rel (0) target = $region17
  $region16: #{regularized_regression_forward.1} parent=0 // pred_region
    _
  $region17: #{regularized_regression_forward.1} parent=0 // pred_fallthru
    _
  // Predicated region
  $region18: #{regularized_regression_forward.1} parent=0 // pred_check
    _
  $region19: #{regularized_regression_forward.1} parent=0 // pred_check_branch
    %21 = sbr.rel (0) target = $region21
  $region20: #{regularized_regression_forward.1} parent=0 // pred_region
    _
  $region21: #{regularized_regression_forward.1} parent=0 // pred_fallthru
    _
  // Predicated region
  $region22: #{regularized_regression_forward.1} parent=0 // pred_check
    _
  $region23: #{regularized_regression_forward.1} parent=0 // pred_check_branch
    %23 = sbr.rel (0) target = $region25
  $region24: #{regularized_regression_forward.1} parent=0 // pred_region
    _
  $region25: #{regularized_regression_forward.1} parent=0 // pred_fallthru
    _
  // Predicated region
  $region26: #{regularized_regression_forward.1} parent=0 // pred_check
    _
  $region27: #{regularized_regression_forward.1} parent=0 // pred_check_branch
    %25 = sbr.rel (0) target = $region29
  $region28: #{regularized_regression_forward.1} parent=0 // pred_region
    _
  $region29: #{regularized_regression_forward.1} parent=0 // pred_fallthru
    _
  %v26 = vld [vmem:[%s0] sm:$0xff]
  %v27 = vld [vmem:[%s1] sm:$0xff]
  %v28 = vld [vmem:[%s1 + $0x8] sm:$0xff]
  %v29 = vld [vmem:[%s2] sm:$0x1]
  %v31 = vlaneseq
  %v32 = vshrl.u32 %v31, 7
  %v33 = vsub.s32 0, %v32
  %v34 = vrot.slane %v29, %v33
  %vm36 = vcmask 130048
  %v38 = vsel %vm36, %v26, 0
  %40 = vmatprep.subr.mxu0 0.0
  %41 = vmatpush1.msra.mxu0 %v27
  %42 = vmatprep.subr.mxu0 0.0
  %43 = vmatpush1.msra.mxu0 %v28
  %44 = vmatprep.subr.mxu0 0.0
  %45 = vmatpush1.msra.mxu0 0.0
  %46 = vmatprep.subr.mxu0 0.0
  %47 = vmatpush1.msra.mxu0 0.0
  %48 = vmatprep.subr.mxu0 0.0
  %49 = vmatpush1.msra.mxu0 0.0
  %50 = vmatprep.subr.mxu0 0.0
  %51 = vmatpush1.msra.mxu0 0.0
  %52 = vmatprep.subr.mxu0 0.0
  %53 = vmatpush1.msra.mxu0 0.0
  %54 = vmatprep.subr.mxu0 0.0
  %55 = vmatpush1.msra.mxu0 0.0
  %56 = vmatprep.subr.mxu0 0.0
  %57 = vmatpush1.msra.mxu0 0.0
  %58 = vmatprep.subr.mxu0 0.0
  %59 = vmatpush1.msra.mxu0 0.0
  %60 = vmatprep.subr.mxu0 0.0
  %61 = vmatpush1.msra.mxu0 0.0
  %62 = vmatprep.subr.mxu0 0.0
  %63 = vmatpush1.msra.mxu0 0.0
  %64 = vmatprep.subr.mxu0 0.0
  %65 = vmatpush1.msra.mxu0 0.0
  %66 = vmatprep.subr.mxu0 0.0
  %67 = vmatpush1.msra.mxu0 0.0
  %68 = vmatprep.subr.mxu0 0.0
  %69 = vmatpush1.msra.mxu0 0.0
  %70 = vmatprep.subr.mxu0 0.0
  %71 = vmatpush1.msra.mxu0 0.0
  %72 = vmatprep.subr.mxu0 0.0
  %73 = vmatpush1.msra.mxu0 0.0
  %74 = vmatprep.subr.mxu0 0.0
  %75 = vmatpush1.msra.mxu0 0.0
  %76 = vmatprep.subr.mxu0 0.0
  %77 = vmatpush1.msra.mxu0 0.0
  %78 = vmatprep.subr.mxu0 0.0
  %79 = vmatpush1.msra.mxu0 0.0
  %80 = vmatprep.subr.mxu0 0.0
  %81 = vmatpush1.msra.mxu0 0.0
  %82 = vmatprep.subr.mxu0 0.0
  %83 = vmatpush1.msra.mxu0 0.0
  %84 = vmatprep.subr.mxu0 0.0
  %85 = vmatpush1.msra.mxu0 0.0
  %86 = vmatprep.subr.mxu0 0.0
  %87 = vmatpush1.msra.mxu0 0.0
  %88 = vmatprep.subr.mxu0 0.0
  %89 = vmatpush1.msra.mxu0 0.0
  %90 = vmatprep.subr.mxu0 0.0
  %91 = vmatpush1.msra.mxu0 0.0
  %92 = vmatprep.subr.mxu0 0.0
  %93 = vmatpush1.msra.mxu0 0.0
  %94 = vmatprep.subr.mxu0 0.0
  %95 = vmatpush1.msra.mxu0 0.0
  %96 = vmatprep.subr.mxu0 0.0
  %97 = vmatpush1.msra.mxu0 0.0
  %98 = vmatprep.subr.mxu0 0.0
  %99 = vmatpush1.msra.mxu0 0.0
  %100 = vmatprep.subr.mxu0 0.0
  %101 = vmatpush1.msra.mxu0 0.0
  %102 = vmatprep.subr.mxu0 0.0
  %103 = vmatpush1.msra.mxu0 0.0
  %104 = vmatprep.mubr.f32.mxu0 0.0
  %105 = vmatmul.mubr.f32.gmra.mrb[0].mxu0 %v38
  %v106 = vpop.f32.mrb[0].mxu0
  %v107 = vadd.f32 %v34, %v106
  %v108 = vpop.f32.mrb[0].mxu0
  %109 = vdwg.mxu0
  %v110 = vmul.f32 %v107, 0.01
  %v111 = vmax.f32 %v107, %v110
  %v112 = vld [vmem:[%s3] sm:$0xff]
  %v113 = vld [vmem:[%s3 + $0x8] sm:$0xff]
  %v114 = vld [vmem:[%s3 + $0x10] sm:$0xff]
  %v115 = vld [vmem:[%s3 + $0x18] sm:$0xff]
  %v116 = vld [vmem:[%s3 + $0x20] sm:$0xff]
  %v117 = vld [vmem:[%s3 + $0x28] sm:$0xff]
  %v118 = vld [vmem:[%s3 + $0x30] sm:$0xff]
  %v119 = vld [vmem:[%s3 + $0x38] sm:$0xff]
  %v120 = vld [vmem:[%s3 + $0x40] sm:$0xff]
  %v121 = vld [vmem:[%s3 + $0x48] sm:$0xff]
  %v122 = vld [vmem:[%s3 + $0x50] sm:$0xff]
  %v123 = vld [vmem:[%s3 + $0x58] sm:$0xff]
  %v124 = vld [vmem:[%s3 + $0x60] sm:$0xff]
  %v125 = vld [vmem:[%s3 + $0x68] sm:$0xff]
  %v126 = vld [vmem:[%s3 + $0x70] sm:$0xff]
  %v127 = vld [vmem:[%s3 + $0x78] sm:$0xff]
  %v128 = vld [vmem:[%s4] sm:$0x1]
  %v129 = vlaneseq
  %v130 = vshrl.u32 %v129, 7
  %v131 = vsub.s32 0, %v130
  %v132 = vrot.slane %v128, %v131
  %133 = vmatprep.subr.mxu0 0.0
  %134 = vmatpush1.msra.mxu0 %v112
  %135 = vmatprep.subr.mxu0 0.0
  %136 = vmatpush1.msra.mxu0 %v113
  %137 = vmatprep.subr.mxu0 0.0
  %138 = vmatpush1.msra.mxu0 %v114
  %139 = vmatprep.subr.mxu0 0.0
  %140 = vmatpush1.msra.mxu0 %v115
  %141 = vmatprep.subr.mxu0 0.0
  %142 = vmatpush1.msra.mxu0 %v116
  %143 = vmatprep.subr.mxu0 0.0
  %144 = vmatpush1.msra.mxu0 %v117
  %145 = vmatprep.subr.mxu0 0.0
  %146 = vmatpush1.msra.mxu0 %v118
  %147 = vmatprep.subr.mxu0 0.0
  %148 = vmatpush1.msra.mxu0 %v119
  %149 = vmatprep.subr.mxu0 0.0
  %150 = vmatpush1.msra.mxu0 %v120
  %151 = vmatprep.subr.mxu0 0.0
  %152 = vmatpush1.msra.mxu0 %v121
  %153 = vmatprep.subr.mxu0 0.0
  %154 = vmatpush1.msra.mxu0 %v122
  %155 = vmatprep.subr.mxu0 0.0
  %156 = vmatpush1.msra.mxu0 %v123
  %157 = vmatprep.subr.mxu0 0.0
  %158 = vmatpush1.msra.mxu0 %v124
  %159 = vmatprep.subr.mxu0 0.0
  %160 = vmatpush1.msra.mxu0 %v125
  %161 = vmatprep.subr.mxu0 0.0
  %162 = vmatpush1.msra.mxu0 %v126
  %163 = vmatprep.subr.mxu0 0.0
  %164 = vmatpush1.msra.mxu0 %v127
  %165 = vmatprep.subr.mxu0 0.0
  %166 = vmatpush1.msra.mxu0 0.0
  %167 = vmatprep.subr.mxu0 0.0
  %168 = vmatpush1.msra.mxu0 0.0
  %169 = vmatprep.subr.mxu0 0.0
  %170 = vmatpush1.msra.mxu0 0.0
  %171 = vmatprep.subr.mxu0 0.0
  %172 = vmatpush1.msra.mxu0 0.0
  %173 = vmatprep.subr.mxu0 0.0
  %174 = vmatpush1.msra.mxu0 0.0
  %175 = vmatprep.subr.mxu0 0.0
  %176 = vmatpush1.msra.mxu0 0.0
  %177 = vmatprep.subr.mxu0 0.0
  %178 = vmatpush1.msra.mxu0 0.0
  %179 = vmatprep.subr.mxu0 0.0
  %180 = vmatpush1.msra.mxu0 0.0
  %181 = vmatprep.subr.mxu0 0.0
  %182 = vmatpush1.msra.mxu0 0.0
  %183 = vmatprep.subr.mxu0 0.0
  %184 = vmatpush1.msra.mxu0 0.0
  %185 = vmatprep.subr.mxu0 0.0
  %186 = vmatpush1.msra.mxu0 0.0
  %187 = vmatprep.subr.mxu0 0.0
  %188 = vmatpush1.msra.mxu0 0.0
  %189 = vmatprep.subr.mxu0 0.0
  %190 = vmatpush1.msra.mxu0 0.0
  %191 = vmatprep.subr.mxu0 0.0
  %192 = vmatpush1.msra.mxu0 0.0
  %193 = vmatprep.subr.mxu0 0.0
  %194 = vmatpush1.msra.mxu0 0.0
  %195 = vmatprep.subr.mxu0 0.0
  %196 = vmatpush1.msra.mxu0 0.0
  %197 = vmatprep.mubr.f32.mxu0 0.0
  %198 = vmatmul.mubr.f32.gmra.mrb[0].mxu0 %v111
  %v199 = vpop.f32.mrb[0].mxu0
  %v200 = vadd.f32 %v132, %v199
  %v201 = vpop.f32.mrb[0].mxu0
  %202 = vdwg.mxu0
  %v203 = vmul.f32 %v200, 0.01
  %v204 = vmax.f32 %v200, %v203
  %s205 = scalar_lea.vmem %s3, 128
  %v206 = vld [vmem:[%s205] sm:$0xff]
  %v207 = vld [vmem:[%s205 + $0x8] sm:$0xff]
  %v208 = vld [vmem:[%s205 + $0x10] sm:$0xff]
  %v209 = vld [vmem:[%s205 + $0x18] sm:$0xff]
  %v210 = vld [vmem:[%s205 + $0x20] sm:$0xff]
  %v211 = vld [vmem:[%s205 + $0x28] sm:$0xff]
  %v212 = vld [vmem:[%s205 + $0x30] sm:$0xff]
  %v213 = vld [vmem:[%s205 + $0x38] sm:$0xff]
  %v214 = vld [vmem:[%s205 + $0x40] sm:$0xff]
  %v215 = vld [vmem:[%s205 + $0x48] sm:$0xff]
  %v216 = vld [vmem:[%s205 + $0x50] sm:$0xff]
  %v217 = vld [vmem:[%s205 + $0x58] sm:$0xff]
  %v218 = vld [vmem:[%s205 + $0x60] sm:$0xff]
  %v219 = vld [vmem:[%s205 + $0x68] sm:$0xff]
  %v220 = vld [vmem:[%s205 + $0x70] sm:$0xff]
  %v221 = vld [vmem:[%s205 + $0x78] sm:$0xff]
  %v222 = vld [vmem:[%s4 + $0x1] sm:$0x1]
  %v223 = vlaneseq
  %v224 = vshrl.u32 %v223, 7
  %v225 = vsub.s32 0, %v224
  %v226 = vrot.slane %v222, %v225
  %227 = vmatprep.subr.mxu0 0.0
  %228 = vmatpush1.msra.mxu0 %v206
  %229 = vmatprep.subr.mxu0 0.0
  %230 = vmatpush1.msra.mxu0 %v207
  %231 = vmatprep.subr.mxu0 0.0
  %232 = vmatpush1.msra.mxu0 %v208
  %233 = vmatprep.subr.mxu0 0.0
  %234 = vmatpush1.msra.mxu0 %v209
  %235 = vmatprep.subr.mxu0 0.0
  %236 = vmatpush1.msra.mxu0 %v210
  %237 = vmatprep.subr.mxu0 0.0
  %238 = vmatpush1.msra.mxu0 %v211
  %239 = vmatprep.subr.mxu0 0.0
  %240 = vmatpush1.msra.mxu0 %v212
  %241 = vmatprep.subr.mxu0 0.0
  %242 = vmatpush1.msra.mxu0 %v213
  %243 = vmatprep.subr.mxu0 0.0
  %244 = vmatpush1.msra.mxu0 %v214
  %245 = vmatprep.subr.mxu0 0.0
  %246 = vmatpush1.msra.mxu0 %v215
  %247 = vmatprep.subr.mxu0 0.0
  %248 = vmatpush1.msra.mxu0 %v216
  %249 = vmatprep.subr.mxu0 0.0
  %250 = vmatpush1.msra.mxu0 %v217
  %251 = vmatprep.subr.mxu0 0.0
  %252 = vmatpush1.msra.mxu0 %v218
  %253 = vmatprep.subr.mxu0 0.0
  %254 = vmatpush1.msra.mxu0 %v219
  %255 = vmatprep.subr.mxu0 0.0
  %256 = vmatpush1.msra.mxu0 %v220
  %257 = vmatprep.subr.mxu0 0.0
  %258 = vmatpush1.msra.mxu0 %v221
  %259 = vmatprep.subr.mxu0 0.0
  %260 = vmatpush1.msra.mxu0 0.0
  %261 = vmatprep.subr.mxu0 0.0
  %262 = vmatpush1.msra.mxu0 0.0
  %263 = vmatprep.subr.mxu0 0.0
  %264 = vmatpush1.msra.mxu0 0.0
  %265 = vmatprep.subr.mxu0 0.0
  %266 = vmatpush1.msra.mxu0 0.0
  %267 = vmatprep.subr.mxu0 0.0
  %268 = vmatpush1.msra.mxu0 0.0
  %269 = vmatprep.subr.mxu0 0.0
  %270 = vmatpush1.msra.mxu0 0.0
  %271 = vmatprep.subr.mxu0 0.0
  %272 = vmatpush1.msra.mxu0 0.0
  %273 = vmatprep.subr.mxu0 0.0
  %274 = vmatpush1.msra.mxu0 0.0
  %275 = vmatprep.subr.mxu0 0.0
  %276 = vmatpush1.msra.mxu0 0.0
  %277 = vmatprep.subr.mxu0 0.0
  %278 = vmatpush1.msra.mxu0 0.0
  %279 = vmatprep.subr.mxu0 0.0
  %280 = vmatpush1.msra.mxu0 0.0
  %281 = vmatprep.subr.mxu0 0.0
  %282 = vmatpush1.msra.mxu0 0.0
  %283 = vmatprep.subr.mxu0 0.0
  %284 = vmatpush1.msra.mxu0 0.0
  %285 = vmatprep.subr.mxu0 0.0
  %286 = vmatpush1.msra.mxu0 0.0
  %287 = vmatprep.subr.mxu0 0.0
  %288 = vmatpush1.msra.mxu0 0.0
  %289 = vmatprep.subr.mxu0 0.0
  %290 = vmatpush1.msra.mxu0 0.0
  %291 = vmatprep.mubr.f32.mxu0 0.0
  %292 = vmatmul.mubr.f32.gmra.mrb[0].mxu0 %v204
  %v293 = vpop.f32.mrb[0].mxu0
  %v294 = vadd.f32 %v226, %v293
  %v295 = vpop.f32.mrb[0].mxu0
  %296 = vdwg.mxu0
  %v297 = vmul.f32 %v294, 0.01
  %v298 = vmax.f32 %v294, %v297
  %v299 = vld [vmem:[%s5] sm:$0xff]
  %v300 = vld [vmem:[%s5 + $0x8] sm:$0xff]
  %v301 = vld [vmem:[%s5 + $0x10] sm:$0xff]
  %v302 = vld [vmem:[%s5 + $0x18] sm:$0xff]
  %v303 = vld [vmem:[%s5 + $0x20] sm:$0xff]
  %v304 = vld [vmem:[%s5 + $0x28] sm:$0xff]
  %v305 = vld [vmem:[%s5 + $0x30] sm:$0xff]
  %v306 = vld [vmem:[%s5 + $0x38] sm:$0xff]
  %v307 = vld [vmem:[%s5 + $0x40] sm:$0xff]
  %v308 = vld [vmem:[%s5 + $0x48] sm:$0xff]
  %v309 = vld [vmem:[%s5 + $0x50] sm:$0xff]
  %v310 = vld [vmem:[%s5 + $0x58] sm:$0xff]
  %v311 = vld [vmem:[%s5 + $0x60] sm:$0xff]
  %v312 = vld [vmem:[%s5 + $0x68] sm:$0xff]
  %v313 = vld [vmem:[%s5 + $0x70] sm:$0xff]
  %v314 = vld [vmem:[%s5 + $0x78] sm:$0xff]
  %v315 = vld [vmem:[%s6] sm:$0x1]
  %v317 = vlaneseq
  %v318 = vshrl.u32 %v317, 7
  %v319 = vsub.s32 0, %v318
  %v320 = vrot.slane %v315, %v319
  %322 = vmatprep.subr.mxu0 0.0
  %323 = vmatpush1.msra.mxu0 %v299
  %324 = vmatprep.subr.mxu0 0.0
  %325 = vmatpush1.msra.mxu0 %v300
  %326 = vmatprep.subr.mxu0 0.0
  %327 = vmatpush1.msra.mxu0 %v301
  %328 = vmatprep.subr.mxu0 0.0
  %329 = vmatpush1.msra.mxu0 %v302
  %330 = vmatprep.subr.mxu0 0.0
  %331 = vmatpush1.msra.mxu0 %v303
  %332 = vmatprep.subr.mxu0 0.0
  %333 = vmatpush1.msra.mxu0 %v304
  %334 = vmatprep.subr.mxu0 0.0
  %335 = vmatpush1.msra.mxu0 %v305
  %336 = vmatprep.subr.mxu0 0.0
  %337 = vmatpush1.msra.mxu0 %v306
  %338 = vmatprep.subr.mxu0 0.0
  %339 = vmatpush1.msra.mxu0 %v307
  %340 = vmatprep.subr.mxu0 0.0
  %341 = vmatpush1.msra.mxu0 %v308
  %342 = vmatprep.subr.mxu0 0.0
  %343 = vmatpush1.msra.mxu0 %v309
  %344 = vmatprep.subr.mxu0 0.0
  %345 = vmatpush1.msra.mxu0 %v310
  %346 = vmatprep.subr.mxu0 0.0
  %347 = vmatpush1.msra.mxu0 %v311
  %348 = vmatprep.subr.mxu0 0.0
  %349 = vmatpush1.msra.mxu0 %v312
  %350 = vmatprep.subr.mxu0 0.0
  %351 = vmatpush1.msra.mxu0 %v313
  %352 = vmatprep.subr.mxu0 0.0
  %353 = vmatpush1.msra.mxu0 %v314
  %354 = vmatprep.subr.mxu0 0.0
  %355 = vmatpush1.msra.mxu0 0.0
  %356 = vmatprep.subr.mxu0 0.0
  %357 = vmatpush1.msra.mxu0 0.0
  %358 = vmatprep.subr.mxu0 0.0
  %359 = vmatpush1.msra.mxu0 0.0
  %360 = vmatprep.subr.mxu0 0.0
  %361 = vmatpush1.msra.mxu0 0.0
  %362 = vmatprep.subr.mxu0 0.0
  %363 = vmatpush1.msra.mxu0 0.0
  %364 = vmatprep.subr.mxu0 0.0
  %365 = vmatpush1.msra.mxu0 0.0
  %366 = vmatprep.subr.mxu0 0.0
  %367 = vmatpush1.msra.mxu0 0.0
  %368 = vmatprep.subr.mxu0 0.0
  %369 = vmatpush1.msra.mxu0 0.0
  %370 = vmatprep.subr.mxu0 0.0
  %371 = vmatpush1.msra.mxu0 0.0
  %372 = vmatprep.subr.mxu0 0.0
  %373 = vmatpush1.msra.mxu0 0.0
  %374 = vmatprep.subr.mxu0 0.0
  %375 = vmatpush1.msra.mxu0 0.0
  %376 = vmatprep.subr.mxu0 0.0
  %377 = vmatpush1.msra.mxu0 0.0
  %378 = vmatprep.subr.mxu0 0.0
  %379 = vmatpush1.msra.mxu0 0.0
  %380 = vmatprep.subr.mxu0 0.0
  %381 = vmatpush1.msra.mxu0 0.0
  %382 = vmatprep.subr.mxu0 0.0
  %383 = vmatpush1.msra.mxu0 0.0
  %384 = vmatprep.subr.mxu0 0.0
  %385 = vmatpush1.msra.mxu0 0.0
  %386 = vmatprep.mubr.f32.mxu0 0.0
  %387 = vmatmul.mubr.f32.gmra.mrb[0].mxu0 %v298
  %v388 = vpop.f32.mrb[0].mxu0
  %v389 = vadd.f32 %v320, %v388
  %v390 = vpop.f32.mrb[0].mxu0
  %391 = vdwg.mxu0
  %vm392 = vcmask 31744
  %393 = vst.msk [vmem:[%s7] sm:$0xff] %vm392, %v389
  // Predicated region
  $region30: #{regularized_regression_forward.1} parent=0 // pred_check
    _
  $region31: #{regularized_regression_forward.1} parent=0 // pred_check_branch
    %395 = sbr.rel (0) target = $region33
  $region32: #{regularized_regression_forward.1} parent=0 // pred_region
    _
  $region33: #{regularized_regression_forward.1} parent=0 // pred_fallthru
    _
  // Predicated region
  $region34: #{regularized_regression_forward.1} parent=0 // pred_check
    _
  $region35: #{regularized_regression_forward.1} parent=0 // pred_check_branch
    %397 = sbr.rel (0) target = $region37
  $region36: #{regularized_regression_forward.1} parent=0 // pred_region
    _
  $region37: #{regularized_regression_forward.1} parent=0 // pred_fallthru
    _

// kernel: regularized_regression_forward.1
$region0: #{regularized_regression_forward.1}
  #allocation0 [shape = 'u32[]', space=smem, size = 0x4, offset = 0x4, fixed_abs, tag = 'smem constant byte address 0x4 - core index']
  #allocation1 [shape = 'u32[144,128]{1,0:T(1,128)}', space=vmem, size = 0x12000, scoped, tag = 'internal scratch']
  %s0 = inlined_call_operand.vmem [shape: f32[8,16], index: 0, kind: input, shape index: {}]
  %s1 = inlined_call_operand.vmem [shape: f32[16,128], index: 1, kind: input, shape index: {}]
  %s2 = inlined_call_operand.vmem [shape: f32[1,128], index: 2, kind: input, shape index: {}]
  %s3 = inlined_call_operand.vmem [shape: f32[2,128,128], index: 3, kind: input, shape index: {}]
  %s4 = inlined_call_operand.vmem [shape: f32[2,128], index: 4, kind: input, shape index: {}]
  %s5 = inlined_call_operand.vmem [shape: f32[128,4], index: 5, kind: input, shape index: {}]
  %s6 = inlined_call_operand.vmem [shape: f32[1,4], index: 6, kind: input, shape index: {}]
  %s7 = inlined_call_operand.vmem [shape: f32[8,4], index: 7, kind: output, shape index: {}]
  %s8 = sld [smem:[#allocation0]]
  $region38: #{regularized_regression_forward.1} parent=0
    _
  %s10 = ssub.s32 1, %s8
  %s11 = scalar_select 0, %s10, %s8
  // Predicated region
  $region2: #{regularized_regression_forward.1} parent=0 // pred_check
    _
  $region3: #{regularized_regression_forward.1} parent=0 // pred_check_branch
    %13 = sbr.rel (0) target = $region5
  $region4: #{regularized_regression_forward.1} parent=0 // pred_region
    _
  $region5: #{regularized_regression_forward.1} parent=0 // pred_fallthru
    _
  // Predicated region
  $region6: #{regularized_regression_forward.1} parent=0 // pred_check
    _
  $region7: #{regularized_regression_forward.1} parent=0 // pred_check_branch
    %15 = sbr.rel (0) target = $region9
  $region8: #{regularized_regression_forward.1} parent=0 // pred_region
    _
  $region9: #{regularized_regression_forward.1} parent=0 // pred_fallthru
    _
  // Predicated region
  $region10: #{regularized_regression_forward.1} parent=0 // pred_check
    _
  $region11: #{regularized_regression_forward.1} parent=0 // pred_check_branch
    %17 = sbr.rel (0) target = $region13
  $region12: #{regularized_regression_forward.1} parent=0 // pred_region
    _
  $region13: #{regularized_regression_forward.1} parent=0 // pred_fallthru
    _
  // Predicated region
  $region14: #{regularized_regression_forward.1} parent=0 // pred_check
    _
  $region15: #{regularized_regression_forward.1} parent=0 // pred_check_branch
    %19 = sbr.rel (0) target = $region17
  $region16: #{regularized_regression_forward.1} parent=0 // pred_region
    _
  $region17: #{regularized_regression_forward.1} parent=0 // pred_fallthru
    _
  // Predicated region
  $region18: #{regularized_regression_forward.1} parent=0 // pred_check
    _
  $region19: #{regularized_regression_forward.1} parent=0 // pred_check_branch
    %21 = sbr.rel (0) target = $region21
  $region20: #{regularized_regression_forward.1} parent=0 // pred_region
    _
  $region21: #{regularized_regression_forward.1} parent=0 // pred_fallthru
    _
  // Predicated region
  $region22: #{regularized_regression_forward.1} parent=0 // pred_check
    _
  $region23: #{regularized_regression_forward.1} parent=0 // pred_check_branch
    %23 = sbr.rel (0) target = $region25
  $region24: #{regularized_regression_forward.1} parent=0 // pred_region
    _
  $region25: #{regularized_regression_forward.1} parent=0 // pred_fallthru
    _
  // Predicated region
  $region26: #{regularized_regression_forward.1} parent=0 // pred_check
    _
  $region27: #{regularized_regression_forward.1} parent=0 // pred_check_branch
    %25 = sbr.rel (0) target = $region29
  $region28: #{regularized_regression_forward.1} parent=0 // pred_region
    _
  $region29: #{regularized_regression_forward.1} parent=0 // pred_fallthru
    _
  %v26 = vld [vmem:[%s0] sm:$0xff]
  %v27 = vld [vmem:[%s1] sm:$0xff]
  %v28 = vld [vmem:[%s1 + $0x8] sm:$0xff]
  %v29 = vld [vmem:[%s2] sm:$0x1]
  %v31 = vlaneseq
  %v32 = vshrl.u32 %v31, 7
  %v33 = vsub.s32 0, %v32
  %v34 = vrot.slane %v29, %v33
  %vm36 = vcmask 130048
  %v38 = vsel %vm36, %v26, 0
  %40 = vmatprep.subr.mxu0 0.0
  %41 = vmatpush1.msra.mxu0 %v27
  %42 = vmatprep.subr.mxu0 0.0
  %43 = vmatpush1.msra.mxu0 %v28
  %44 = vmatprep.subr.mxu0 0.0
  %45 = vmatpush1.msra.mxu0 0.0
  %46 = vmatprep.subr.mxu0 0.0
  %47 = vmatpush1.msra.mxu0 0.0
  %48 = vmatprep.subr.mxu0 0.0
  %49 = vmatpush1.msra.mxu0 0.0
  %50 = vmatprep.subr.mxu0 0.0
  %51 = vmatpush1.msra.mxu0 0.0
  %52 = vmatprep.subr.mxu0 0.0
  %53 = vmatpush1.msra.mxu0 0.0
  %54 = vmatprep.subr.mxu0 0.0
  %55 = vmatpush1.msra.mxu0 0.0
  %56 = vmatprep.subr.mxu0 0.0
  %57 = vmatpush1.msra.mxu0 0.0
  %58 = vmatprep.subr.mxu0 0.0
  %59 = vmatpush1.msra.mxu0 0.0
  %60 = vmatprep.subr.mxu0 0.0
  %61 = vmatpush1.msra.mxu0 0.0
  %62 = vmatprep.subr.mxu0 0.0
  %63 = vmatpush1.msra.mxu0 0.0
  %64 = vmatprep.subr.mxu0 0.0
  %65 = vmatpush1.msra.mxu0 0.0
  %66 = vmatprep.subr.mxu0 0.0
  %67 = vmatpush1.msra.mxu0 0.0
  %68 = vmatprep.subr.mxu0 0.0
  %69 = vmatpush1.msra.mxu0 0.0
  %70 = vmatprep.subr.mxu0 0.0
  %71 = vmatpush1.msra.mxu0 0.0
  %72 = vmatprep.subr.mxu0 0.0
  %73 = vmatpush1.msra.mxu0 0.0
  %74 = vmatprep.subr.mxu0 0.0
  %75 = vmatpush1.msra.mxu0 0.0
  %76 = vmatprep.subr.mxu0 0.0
  %77 = vmatpush1.msra.mxu0 0.0
  %78 = vmatprep.subr.mxu0 0.0
  %79 = vmatpush1.msra.mxu0 0.0
  %80 = vmatprep.subr.mxu0 0.0
  %81 = vmatpush1.msra.mxu0 0.0
  %82 = vmatprep.subr.mxu0 0.0
  %83 = vmatpush1.msra.mxu0 0.0
  %84 = vmatprep.subr.mxu0 0.0
  %85 = vmatpush1.msra.mxu0 0.0
  %86 = vmatprep.subr.mxu0 0.0
  %87 = vmatpush1.msra.mxu0 0.0
  %88 = vmatprep.subr.mxu0 0.0
  %89 = vmatpush1.msra.mxu0 0.0
  %90 = vmatprep.subr.mxu0 0.0
  %91 = vmatpush1.msra.mxu0 0.0
  %92 = vmatprep.subr.mxu0 0.0
  %93 = vmatpush1.msra.mxu0 0.0
  %94 = vmatprep.subr.mxu0 0.0
  %95 = vmatpush1.msra.mxu0 0.0
  %96 = vmatprep.subr.mxu0 0.0
  %97 = vmatpush1.msra.mxu0 0.0
  %98 = vmatprep.subr.mxu0 0.0
  %99 = vmatpush1.msra.mxu0 0.0
  %100 = vmatprep.subr.mxu0 0.0
  %101 = vmatpush1.msra.mxu0 0.0
  %102 = vmatprep.subr.mxu0 0.0
  %103 = vmatpush1.msra.mxu0 0.0
  %104 = vmatprep.mubr.f32.mxu0 0.0
  %105 = vmatmul.mubr.f32.gmra.mrb[0].mxu0 %v38
  %v106 = vpop.f32.mrb[0].mxu0
  %v107 = vadd.f32 %v34, %v106
  %v108 = vpop.f32.mrb[0].mxu0
  %109 = vdwg.mxu0
  %v110 = vmul.f32 %v107, 0.01
  %v111 = vmax.f32 %v107, %v110
  %v112 = vld [vmem:[%s3] sm:$0xff]
  %v113 = vld [vmem:[%s3 + $0x8] sm:$0xff]
  %v114 = vld [vmem:[%s3 + $0x10] sm:$0xff]
  %v115 = vld [vmem:[%s3 + $0x18] sm:$0xff]
  %v116 = vld [vmem:[%s3 + $0x20] sm:$0xff]
  %v117 = vld [vmem:[%s3 + $0x28] sm:$0xff]
  %v118 = vld [vmem:[%s3 + $0x30] sm:$0xff]
  %v119 = vld [vmem:[%s3 + $0x38] sm:$0xff]
  %v120 = vld [vmem:[%s3 + $0x40] sm:$0xff]
  %v121 = vld [vmem:[%s3 + $0x48] sm:$0xff]
  %v122 = vld [vmem:[%s3 + $0x50] sm:$0xff]
  %v123 = vld [vmem:[%s3 + $0x58] sm:$0xff]
  %v124 = vld [vmem:[%s3 + $0x60] sm:$0xff]
  %v125 = vld [vmem:[%s3 + $0x68] sm:$0xff]
  %v126 = vld [vmem:[%s3 + $0x70] sm:$0xff]
  %v127 = vld [vmem:[%s3 + $0x78] sm:$0xff]
  %v128 = vld [vmem:[%s4] sm:$0x1]
  %v129 = vlaneseq
  %v130 = vshrl.u32 %v129, 7
  %v131 = vsub.s32 0, %v130
  %v132 = vrot.slane %v128, %v131
  %133 = vmatprep.subr.mxu0 0.0
  %134 = vmatpush1.msra.mxu0 %v112
  %135 = vmatprep.subr.mxu0 0.0
  %136 = vmatpush1.msra.mxu0 %v113
  %137 = vmatprep.subr.mxu0 0.0
  %138 = vmatpush1.msra.mxu0 %v114
  %139 = vmatprep.subr.mxu0 0.0
  %140 = vmatpush1.msra.mxu0 %v115
  %141 = vmatprep.subr.mxu0 0.0
  %142 = vmatpush1.msra.mxu0 %v116
  %143 = vmatprep.subr.mxu0 0.0
  %144 = vmatpush1.msra.mxu0 %v117
  %145 = vmatprep.subr.mxu0 0.0
  %146 = vmatpush1.msra.mxu0 %v118
  %147 = vmatprep.subr.mxu0 0.0
  %148 = vmatpush1.msra.mxu0 %v119
  %149 = vmatprep.subr.mxu0 0.0
  %150 = vmatpush1.msra.mxu0 %v120
  %151 = vmatprep.subr.mxu0 0.0
  %152 = vmatpush1.msra.mxu0 %v121
  %153 = vmatprep.subr.mxu0 0.0
  %154 = vmatpush1.msra.mxu0 %v122
  %155 = vmatprep.subr.mxu0 0.0
  %156 = vmatpush1.msra.mxu0 %v123
  %157 = vmatprep.subr.mxu0 0.0
  %158 = vmatpush1.msra.mxu0 %v124
  %159 = vmatprep.subr.mxu0 0.0
  %160 = vmatpush1.msra.mxu0 %v125
  %161 = vmatprep.subr.mxu0 0.0
  %162 = vmatpush1.msra.mxu0 %v126
  %163 = vmatprep.subr.mxu0 0.0
  %164 = vmatpush1.msra.mxu0 %v127
  %165 = vmatprep.subr.mxu0 0.0
  %166 = vmatpush1.msra.mxu0 0.0
  %167 = vmatprep.subr.mxu0 0.0
  %168 = vmatpush1.msra.mxu0 0.0
  %169 = vmatprep.subr.mxu0 0.0
  %170 = vmatpush1.msra.mxu0 0.0
  %171 = vmatprep.subr.mxu0 0.0
  %172 = vmatpush1.msra.mxu0 0.0
  %173 = vmatprep.subr.mxu0 0.0
  %174 = vmatpush1.msra.mxu0 0.0
  %175 = vmatprep.subr.mxu0 0.0
  %176 = vmatpush1.msra.mxu0 0.0
  %177 = vmatprep.subr.mxu0 0.0
  %178 = vmatpush1.msra.mxu0 0.0
  %179 = vmatprep.subr.mxu0 0.0
  %180 = vmatpush1.msra.mxu0 0.0
  %181 = vmatprep.subr.mxu0 0.0
  %182 = vmatpush1.msra.mxu0 0.0
  %183 = vmatprep.subr.mxu0 0.0
  %184 = vmatpush1.msra.mxu0 0.0
  %185 = vmatprep.subr.mxu0 0.0
  %186 = vmatpush1.msra.mxu0 0.0
  %187 = vmatprep.subr.mxu0 0.0
  %188 = vmatpush1.msra.mxu0 0.0
  %189 = vmatprep.subr.mxu0 0.0
  %190 = vmatpush1.msra.mxu0 0.0
  %191 = vmatprep.subr.mxu0 0.0
  %192 = vmatpush1.msra.mxu0 0.0
  %193 = vmatprep.subr.mxu0 0.0
  %194 = vmatpush1.msra.mxu0 0.0
  %195 = vmatprep.subr.mxu0 0.0
  %196 = vmatpush1.msra.mxu0 0.0
  %197 = vmatprep.mubr.f32.mxu0 0.0
  %198 = vmatmul.mubr.f32.gmra.mrb[0].mxu0 %v111
  %v199 = vpop.f32.mrb[0].mxu0
  %v200 = vadd.f32 %v132, %v199
  %v201 = vpop.f32.mrb[0].mxu0
  %202 = vdwg.mxu0
  %v203 = vmul.f32 %v200, 0.01
  %v204 = vmax.f32 %v200, %v203
  %s205 = scalar_lea.vmem %s3, 128
  %v206 = vld [vmem:[%s205] sm:$0xff]
  %v207 = vld [vmem:[%s205 + $0x8] sm:$0xff]
  %v208 = vld [vmem:[%s205 + $0x10] sm:$0xff]
  %v209 = vld [vmem:[%s205 + $0x18] sm:$0xff]
  %v210 = vld [vmem:[%s205 + $0x20] sm:$0xff]
  %v211 = vld [vmem:[%s205 + $0x28] sm:$0xff]
  %v212 = vld [vmem:[%s205 + $0x30] sm:$0xff]
  %v213 = vld [vmem:[%s205 + $0x38] sm:$0xff]
  %v214 = vld [vmem:[%s205 + $0x40] sm:$0xff]
  %v215 = vld [vmem:[%s205 + $0x48] sm:$0xff]
  %v216 = vld [vmem:[%s205 + $0x50] sm:$0xff]
  %v217 = vld [vmem:[%s205 + $0x58] sm:$0xff]
  %v218 = vld [vmem:[%s205 + $0x60] sm:$0xff]
  %v219 = vld [vmem:[%s205 + $0x68] sm:$0xff]
  %v220 = vld [vmem:[%s205 + $0x70] sm:$0xff]
  %v221 = vld [vmem:[%s205 + $0x78] sm:$0xff]
  %v222 = vld [vmem:[%s4 + $0x1] sm:$0x1]
  %v223 = vlaneseq
  %v224 = vshrl.u32 %v223, 7
  %v225 = vsub.s32 0, %v224
  %v226 = vrot.slane %v222, %v225
  %227 = vmatprep.subr.mxu0 0.0
  %228 = vmatpush1.msra.mxu0 %v206
  %229 = vmatprep.subr.mxu0 0.0
  %230 = vmatpush1.msra.mxu0 %v207
  %231 = vmatprep.subr.mxu0 0.0
  %232 = vmatpush1.msra.mxu0 %v208
  %233 = vmatprep.subr.mxu0 0.0
  %234 = vmatpush1.msra.mxu0 %v209
  %235 = vmatprep.subr.mxu0 0.0
  %236 = vmatpush1.msra.mxu0 %v210
  %237 = vmatprep.subr.mxu0 0.0
  %238 = vmatpush1.msra.mxu0 %v211
  %239 = vmatprep.subr.mxu0 0.0
  %240 = vmatpush1.msra.mxu0 %v212
  %241 = vmatprep.subr.mxu0 0.0
  %242 = vmatpush1.msra.mxu0 %v213
  %243 = vmatprep.subr.mxu0 0.0
  %244 = vmatpush1.msra.mxu0 %v214
  %245 = vmatprep.subr.mxu0 0.0
  %246 = vmatpush1.msra.mxu0 %v215
  %247 = vmatprep.subr.mxu0 0.0
  %248 = vmatpush1.msra.mxu0 %v216
  %249 = vmatprep.subr.mxu0 0.0
  %250 = vmatpush1.msra.mxu0 %v217
  %251 = vmatprep.subr.mxu0 0.0
  %252 = vmatpush1.msra.mxu0 %v218
  %253 = vmatprep.subr.mxu0 0.0
  %254 = vmatpush1.msra.mxu0 %v219
  %255 = vmatprep.subr.mxu0 0.0
  %256 = vmatpush1.msra.mxu0 %v220
  %257 = vmatprep.subr.mxu0 0.0
  %258 = vmatpush1.msra.mxu0 %v221
  %259 = vmatprep.subr.mxu0 0.0
  %260 = vmatpush1.msra.mxu0 0.0
  %261 = vmatprep.subr.mxu0 0.0
  %262 = vmatpush1.msra.mxu0 0.0
  %263 = vmatprep.subr.mxu0 0.0
  %264 = vmatpush1.msra.mxu0 0.0
  %265 = vmatprep.subr.mxu0 0.0
  %266 = vmatpush1.msra.mxu0 0.0
  %267 = vmatprep.subr.mxu0 0.0
  %268 = vmatpush1.msra.mxu0 0.0
  %269 = vmatprep.subr.mxu0 0.0
  %270 = vmatpush1.msra.mxu0 0.0
  %271 = vmatprep.subr.mxu0 0.0
  %272 = vmatpush1.msra.mxu0 0.0
  %273 = vmatprep.subr.mxu0 0.0
  %274 = vmatpush1.msra.mxu0 0.0
  %275 = vmatprep.subr.mxu0 0.0
  %276 = vmatpush1.msra.mxu0 0.0
  %277 = vmatprep.subr.mxu0 0.0
  %278 = vmatpush1.msra.mxu0 0.0
  %279 = vmatprep.subr.mxu0 0.0
  %280 = vmatpush1.msra.mxu0 0.0
  %281 = vmatprep.subr.mxu0 0.0
  %282 = vmatpush1.msra.mxu0 0.0
  %283 = vmatprep.subr.mxu0 0.0
  %284 = vmatpush1.msra.mxu0 0.0
  %285 = vmatprep.subr.mxu0 0.0
  %286 = vmatpush1.msra.mxu0 0.0
  %287 = vmatprep.subr.mxu0 0.0
  %288 = vmatpush1.msra.mxu0 0.0
  %289 = vmatprep.subr.mxu0 0.0
  %290 = vmatpush1.msra.mxu0 0.0
  %291 = vmatprep.mubr.f32.mxu0 0.0
  %292 = vmatmul.mubr.f32.gmra.mrb[0].mxu0 %v204
  %v293 = vpop.f32.mrb[0].mxu0
  %v294 = vadd.f32 %v226, %v293
  %v295 = vpop.f32.mrb[0].mxu0
  %296 = vdwg.mxu0
  %v297 = vmul.f32 %v294, 0.01
  %v298 = vmax.f32 %v294, %v297
  %v299 = vld [vmem:[%s5] sm:$0xff]
  %v300 = vld [vmem:[%s5 + $0x8] sm:$0xff]
  %v301 = vld [vmem:[%s5 + $0x10] sm:$0xff]
  %v302 = vld [vmem:[%s5 + $0x18] sm:$0xff]
  %v303 = vld [vmem:[%s5 + $0x20] sm:$0xff]
  %v304 = vld [vmem:[%s5 + $0x28] sm:$0xff]
  %v305 = vld [vmem:[%s5 + $0x30] sm:$0xff]
  %v306 = vld [vmem:[%s5 + $0x38] sm:$0xff]
  %v307 = vld [vmem:[%s5 + $0x40] sm:$0xff]
  %v308 = vld [vmem:[%s5 + $0x48] sm:$0xff]
  %v309 = vld [vmem:[%s5 + $0x50] sm:$0xff]
  %v310 = vld [vmem:[%s5 + $0x58] sm:$0xff]
  %v311 = vld [vmem:[%s5 + $0x60] sm:$0xff]
  %v312 = vld [vmem:[%s5 + $0x68] sm:$0xff]
  %v313 = vld [vmem:[%s5 + $0x70] sm:$0xff]
  %v314 = vld [vmem:[%s5 + $0x78] sm:$0xff]
  %v315 = vld [vmem:[%s6] sm:$0x1]
  %v317 = vlaneseq
  %v318 = vshrl.u32 %v317, 7
  %v319 = vsub.s32 0, %v318
  %v320 = vrot.slane %v315, %v319
  %322 = vmatprep.subr.mxu0 0.0
  %323 = vmatpush1.msra.mxu0 %v299
  %324 = vmatprep.subr.mxu0 0.0
  %325 = vmatpush1.msra.mxu0 %v300
  %326 = vmatprep.subr.mxu0 0.0
  %327 = vmatpush1.msra.mxu0 %v301
  %328 = vmatprep.subr.mxu0 0.0
  %329 = vmatpush1.msra.mxu0 %v302
  %330 = vmatprep.subr.mxu0 0.0
  %331 = vmatpush1.msra.mxu0 %v303
  %332 = vmatprep.subr.mxu0 0.0
  %333 = vmatpush1.msra.mxu0 %v304
  %334 = vmatprep.subr.mxu0 0.0
  %335 = vmatpush1.msra.mxu0 %v305
  %336 = vmatprep.subr.mxu0 0.0
  %337 = vmatpush1.msra.mxu0 %v306
  %338 = vmatprep.subr.mxu0 0.0
  %339 = vmatpush1.msra.mxu0 %v307
  %340 = vmatprep.subr.mxu0 0.0
  %341 = vmatpush1.msra.mxu0 %v308
  %342 = vmatprep.subr.mxu0 0.0
  %343 = vmatpush1.msra.mxu0 %v309
  %344 = vmatprep.subr.mxu0 0.0
  %345 = vmatpush1.msra.mxu0 %v310
  %346 = vmatprep.subr.mxu0 0.0
  %347 = vmatpush1.msra.mxu0 %v311
  %348 = vmatprep.subr.mxu0 0.0
  %349 = vmatpush1.msra.mxu0 %v312
  %350 = vmatprep.subr.mxu0 0.0
  %351 = vmatpush1.msra.mxu0 %v313
  %352 = vmatprep.subr.mxu0 0.0
  %353 = vmatpush1.msra.mxu0 %v314
  %354 = vmatprep.subr.mxu0 0.0
  %355 = vmatpush1.msra.mxu0 0.0
  %356 = vmatprep.subr.mxu0 0.0
  %357 = vmatpush1.msra.mxu0 0.0
  %358 = vmatprep.subr.mxu0 0.0
  %359 = vmatpush1.msra.mxu0 0.0
  %360 = vmatprep.subr.mxu0 0.0
  %361 = vmatpush1.msra.mxu0 0.0
  %362 = vmatprep.subr.mxu0 0.0
  %363 = vmatpush1.msra.mxu0 0.0
  %364 = vmatprep.subr.mxu0 0.0
  %365 = vmatpush1.msra.mxu0 0.0
  %366 = vmatprep.subr.mxu0 0.0
  %367 = vmatpush1.msra.mxu0 0.0
  %368 = vmatprep.subr.mxu0 0.0
  %369 = vmatpush1.msra.mxu0 0.0
  %370 = vmatprep.subr.mxu0 0.0
  %371 = vmatpush1.msra.mxu0 0.0
  %372 = vmatprep.subr.mxu0 0.0
  %373 = vmatpush1.msra.mxu0 0.0
  %374 = vmatprep.subr.mxu0 0.0
  %375 = vmatpush1.msra.mxu0 0.0
  %376 = vmatprep.subr.mxu0 0.0
  %377 = vmatpush1.msra.mxu0 0.0
  %378 = vmatprep.subr.mxu0 0.0
  %379 = vmatpush1.msra.mxu0 0.0
  %380 = vmatprep.subr.mxu0 0.0
  %381 = vmatpush1.msra.mxu0 0.0
  %382 = vmatprep.subr.mxu0 0.0
  %383 = vmatpush1.msra.mxu0 0.0
  %384 = vmatprep.subr.mxu0 0.0
  %385 = vmatpush1.msra.mxu0 0.0
  %386 = vmatprep.mubr.f32.mxu0 0.0
  %387 = vmatmul.mubr.f32.gmra.mrb[0].mxu0 %v298
  %v388 = vpop.f32.mrb[0].mxu0
  %v389 = vadd.f32 %v320, %v388
  %v390 = vpop.f32.mrb[0].mxu0
  %391 = vdwg.mxu0
  %vm392 = vcmask 31744
  %393 = vst.msk [vmem:[%s7] sm:$0xff] %vm392, %v389
  // Predicated region
  $region30: #{regularized_regression_forward.1} parent=0 // pred_check
    _
  $region31: #{regularized_regression_forward.1} parent=0 // pred_check_branch
    %395 = sbr.rel (0) target = $region33
  $region32: #{regularized_regression_forward.1} parent=0 // pred_region
    _
  $region33: #{regularized_regression_forward.1} parent=0 // pred_fallthru
    _
  // Predicated region
  $region34: #{regularized_regression_forward.1} parent=0 // pred_check
    _
  $region35: #{regularized_regression_forward.1} parent=0 // pred_check_branch
    %397 = sbr.rel (0) target = $region37
  $region36: #{regularized_regression_forward.1} parent=0 // pred_region
    _
  $region37: #{regularized_regression_forward.1} parent=0 // pred_fallthru
    _

</llo_original>
